<compile_context>
chip_gen: v5e
topology: v5e:2x2
jax: 0.10.0
libtpu: 0.0.40
codegen_flags: <defaults>
</compile_context>

<pallas_src>
import jax
import jax.numpy as jnp
from jax.experimental import pallas as pl
from jax.experimental.pallas import tpu as pltpu

IN_TEXT = 384
IN_IMAGE = 384
IN_FEATURES = IN_TEXT + IN_IMAGE   # 768, as in nn.Linear(768, 22)
OUT_FEATURES = 22
OUT_PADDED = 128                   # lane-dense output width (multiple of 128)
MAX_TILE_B = 512                   # batch tile; multiple of 8, fits all VMEM budgets
                                   # (v5e 16 MiB / v6e 32 MiB / v7x 32 MiB scoped)


def _fusion_kernel(text_ref, image_ref, w_ref, b_ref, out_ref):
    # Linear(768, 22) over concat([text, image], -1), expressed as two
    # accumulating MXU dots against the weight halves. This avoids
    # materializing the [TILE_B, 768] concat temp in VMEM/vregs and feeds the
    # MXU straight from the input tiles. The 384 split is sublane-aligned
    # (multiple of 8) so the ref slices are free.
    acc = jnp.dot(text_ref[...], w_ref[0:IN_TEXT, :],
                  preferred_element_type=jnp.float32)
    acc += jnp.dot(image_ref[...], w_ref[IN_TEXT:IN_FEATURES, :],
                   preferred_element_type=jnp.float32)
    out_ref[...] = (acc + b_ref[...]).astype(out_ref.dtype)


def _round_up(x, m):
    return ((x + m - 1) // m) * m


def clip_feature_fusion(text_feat, image_feat, weight, bias):
    """text_feat [B,384], image_feat [B,384], weight [768,22], bias [1,22] -> [B,22]"""
    B = text_feat.shape[0]
    # Tile the batch dim; shrink the tile for tiny batches (keep multiple of 8).
    tile_b = min(MAX_TILE_B, _round_up(B, 8))
    grid = (pl.cdiv(B, tile_b),)

    # Wrapper-side layout plumbing: pad N from 22 to 128 zero columns so the
    # kernel's output stores are unmasked lane-dense vst; slice back outside.
    w_pad = jnp.pad(weight, ((0, 0), (0, OUT_PADDED - OUT_FEATURES)))
    b_pad = jnp.pad(bias, ((0, 0), (0, OUT_PADDED - OUT_FEATURES)))

    cost = pl.CostEstimate(
        flops=2 * B * IN_FEATURES * OUT_FEATURES,
        transcendentals=0,
        bytes_accessed=(B * IN_FEATURES * 4            # text + image reads
                        + IN_FEATURES * OUT_PADDED * 4  # weight
                        + B * OUT_PADDED * 4))          # output writes

    out_padded = pl.pallas_call(
        _fusion_kernel,
        out_shape=jax.ShapeDtypeStruct((B, OUT_PADDED), jnp.float32),
        grid=grid,
        in_specs=[
            pl.BlockSpec((tile_b, IN_TEXT), lambda i: (i, 0)),
            pl.BlockSpec((tile_b, IN_IMAGE), lambda i: (i, 0)),
            # weight / bias stay resident across all batch tiles
            pl.BlockSpec((IN_FEATURES, OUT_PADDED), lambda i: (0, 0)),
            pl.BlockSpec((1, OUT_PADDED), lambda i: (0, 0)),
        ],
        out_specs=pl.BlockSpec((tile_b, OUT_PADDED), lambda i: (i, 0)),
        compiler_params=pltpu.CompilerParams(
            dimension_semantics=("parallel",)),
        cost_estimate=cost,
    )(text_feat, image_feat, w_pad, b_pad)

    return out_padded[:, :OUT_FEATURES]


if __name__ == "__main__":
    key = jax.random.PRNGKey(0)
    k_text, k_img, k_w, k_b = jax.random.split(key, 4)

    B = 2
    text_feat = jax.random.normal(k_text, (B, IN_TEXT), dtype=jnp.float32)
    image_feat = jax.random.normal(k_img, (B, IN_IMAGE), dtype=jnp.float32)

    # Deterministic nn.Linear-style init: U(-1/sqrt(768), 1/sqrt(768))
    bound = 1.0 / (IN_FEATURES ** 0.5)
    weight = jax.random.uniform(
        k_w, (IN_FEATURES, OUT_FEATURES), dtype=jnp.float32,
        minval=-bound, maxval=bound)
    bias = jax.random.uniform(
        k_b, (1, OUT_FEATURES), dtype=jnp.float32,
        minval=-bound, maxval=bound)

    out = clip_feature_fusion(text_feat, image_feat, weight, bias)
    out = jax.block_until_ready(out)

    # Pure-JAX reference check of the fused forward pass.
    ref = jnp.concatenate([text_feat, image_feat], axis=-1) @ weight + bias
    assert out.shape == (B, OUT_FEATURES)
    assert jnp.allclose(out, ref, atol=1e-5, rtol=1e-5)

    print("KERNEL_OK")
</pallas_src>

<mosaic_0001>
module attributes {stable_mosaic.version = 11 : i64} {
  func.func @_fusion_kernel(%arg0: i32, %arg1: memref<8x384xf32, #tpu.memory_space<vmem>>, %arg2: memref<8x384xf32, #tpu.memory_space<vmem>>, %arg3: memref<768x128xf32, #tpu.memory_space<vmem>>, %arg4: memref<1x128xf32, #tpu.memory_space<vmem>>, %arg5: memref<8x128xf32, #tpu.memory_space<vmem>>) attributes {dimension_semantics = [#tpu.dimension_semantics<parallel>], iteration_bounds = array<i64: 1>, scalar_prefetch = 0 : i64, scratch_operands = 0 : i64, tpu.core_type = #tpu.core_type<tc>, window_params = [{transform_indices = @transform_0, window_bounds = array<i64: 8, 384>}, {transform_indices = @transform_1, window_bounds = array<i64: 8, 384>}, {pipeline_mode = #tpu.pipeline_mode<synchronous>, transform_indices = @transform_2, window_bounds = array<i64: 768, 128>}, {pipeline_mode = #tpu.pipeline_mode<synchronous>, transform_indices = @transform_3, window_bounds = array<i64: 1, 128>}, {transform_indices = @transform_4, window_bounds = array<i64: 8, 128>}]} {
    %c0 = arith.constant 0 : index
    %c0_0 = arith.constant 0 : index
    %0 = vector.load %arg1[%c0, %c0_0] : memref<8x384xf32, #tpu.memory_space<vmem>>, vector<8x384xf32>
    %c0_1 = arith.constant 0 : index
    %c0_2 = arith.constant 0 : index
    %1 = vector.load %arg3[%c0_1, %c0_2] : memref<768x128xf32, #tpu.memory_space<vmem>>, vector<384x128xf32>
    %cst = arith.constant dense<0.000000e+00> : vector<8x128xf32>
    %2 = tpu.matmul %0, %1, %cst {dimension_numbers = #tpu.dot_dimension_numbers<[1], [0], [0], [1], [0, 0, 1, 1], [], []>} : vector<8x384xf32>, vector<384x128xf32>, vector<8x128xf32> -> vector<8x128xf32>
    %c0_3 = arith.constant 0 : index
    %c0_4 = arith.constant 0 : index
    %3 = vector.load %arg2[%c0_3, %c0_4] : memref<8x384xf32, #tpu.memory_space<vmem>>, vector<8x384xf32>
    %c384 = arith.constant 384 : index
    %c0_5 = arith.constant 0 : index
    %4 = vector.load %arg3[%c384, %c0_5] : memref<768x128xf32, #tpu.memory_space<vmem>>, vector<384x128xf32>
    %cst_6 = arith.constant dense<0.000000e+00> : vector<8x128xf32>
    %5 = tpu.matmul %3, %4, %cst_6 {dimension_numbers = #tpu.dot_dimension_numbers<[1], [0], [0], [1], [0, 0, 1, 1], [], []>} : vector<8x384xf32>, vector<384x128xf32>, vector<8x128xf32> -> vector<8x128xf32>
    %6 = arith.addf %2, %5 : vector<8x128xf32>
    %c0_7 = arith.constant 0 : index
    %c0_8 = arith.constant 0 : index
    %7 = vector.load %arg4[%c0_7, %c0_8] : memref<1x128xf32, #tpu.memory_space<vmem>>, vector<1x128xf32>
    %8 = vector.broadcast %7 : vector<1x128xf32> to vector<8x128xf32>
    %9 = arith.addf %6, %8 : vector<8x128xf32>
    %c0_9 = arith.constant 0 : index
    %c0_10 = arith.constant 0 : index
    %10 = vector.load %arg5[%c0_9, %c0_10] : memref<8x128xf32, #tpu.memory_space<vmem>>, vector<8x128xf32>
    tpu.vector_store %arg5[%c0_9, %c0_10], %9 {strides = array<i32>} : memref<8x128xf32, #tpu.memory_space<vmem>>, vector<8x128xf32>,
    return
  }
  func.func @transform_0(%arg0: i32) -> (i32, i32) {
    %c0_i32 = arith.constant 0 : i32
    %c0_i32_0 = arith.constant 0 : i32
    return %arg0, %c0_i32 : i32, i32
  }
  func.func @transform_1(%arg0: i32) -> (i32, i32) {
    %c0_i32 = arith.constant 0 : i32
    %c0_i32_0 = arith.constant 0 : i32
    return %arg0, %c0_i32 : i32, i32
  }
  func.func @transform_2(%arg0: i32) -> (i32, i32) {
    %c0_i32 = arith.constant 0 : i32
    %c0_i32_0 = arith.constant 0 : i32
    %c0_i32_1 = arith.constant 0 : i32
    return %c0_i32, %c0_i32_0 : i32, i32
  }
  func.func @transform_3(%arg0: i32) -> (i32, i32) {
    %c0_i32 = arith.constant 0 : i32
    %c0_i32_0 = arith.constant 0 : i32
    %c0_i32_1 = arith.constant 0 : i32
    return %c0_i32, %c0_i32_0 : i32, i32
  }
  func.func @transform_4(%arg0: i32) -> (i32, i32) {
    %c0_i32 = arith.constant 0 : i32
    %c0_i32_0 = arith.constant 0 : i32
    return %arg0, %c0_i32 : i32, i32
  }
}

</mosaic_0001>

<llo_original>
// kernel: tpu_custom_call.1
$region0: #{tpu_custom_call.1}
  #allocation0 [shape = 'u32[]', space=smem, size = 0x4, offset = 0x4, fixed_abs, tag = 'smem constant byte address 0x4 - core index']
  #allocation1 [shape = 'u32[72,128]{1,0:T(1,128)}', space=vmem, size = 0x9000, scoped, tag = 'internal scratch']
  %s0 = inlined_call_operand.hbm [shape: f32[2,384], index: 0, kind: input, shape index: {}]
  %s1 = inlined_call_operand.hbm [shape: f32[2,384], index: 1, kind: input, shape index: {}]
  %s2 = inlined_call_operand.hbm [shape: f32[768,128], index: 2, kind: input, shape index: {}]
  %s3 = inlined_call_operand.vmem [shape: f32[1,128], index: 3, kind: input, shape index: {}]
  %s4 = inlined_call_operand.hbm [shape: f32[2,128], index: 4, kind: output, shape index: {}]
  %s5 = sld [smem:[#allocation0]]
  $region38: #{tpu_custom_call.1} parent=0
    _
  %s7 = ssub.s32 1, %s5
  %s8 = scalar_select 0, %s7, %s5
  $region1: #{tpu_custom_call.1} parent=0
    #allocation2 [shape = 'u8[12288]{0}', space=vmem, size = 0x3000, scoped, tag = 'input window, operand 0, single buffered']
    #allocation3 [shape = 's32[1]{0}', space=sflag, size = 0x4, scoped, tag = 'scoped memory for tpu_custom_call.1']
    #allocation4 [shape = 's32[1]{0}', space=sflag, size = 0x4, scoped, tag = 'scoped memory for tpu_custom_call.1']
    #allocation5 [shape = 'u8[12288]{0}', space=vmem, size = 0x3000, scoped, tag = 'input window, operand 1, single buffered']
    #allocation6 [shape = 's32[1]{0}', space=sflag, size = 0x4, scoped, tag = 'scoped memory for tpu_custom_call.1']
    #allocation7 [shape = 'u8[393216]{0}', space=vmem, size = 0x60000, scoped, tag = 'input window, operand 2, single buffered']
    #allocation8 [shape = 'u8[4096]{0}', space=vmem, size = 0x1000, scoped, tag = 'output window, operand 0, single buffered']
    %9 = vsyncpa [#allocation3], 0
    %10 = vsyncpa [#allocation6], 0
    %11 = vsyncpa [#allocation4], 0
    // Predicated region
    $region2: #{tpu_custom_call.1} parent=1 // pred_check
      _
    $region3: #{tpu_custom_call.1} parent=1 // pred_check_branch
      %13 = sbr.rel (0) target = $region5
    $region4: #{tpu_custom_call.1} parent=1 // pred_region
      %15 = vsyncadd [#allocation3], 288
      %s16 = sshll.u32 %s0, 4
      %s17 = int_to_ptr.hbm [resolvable:$true] %s16
      %s18 = sshll.u32 [#allocation2], 4
      %s19 = int_to_ptr.vmem [resolvable:$true] %s18
      %24 = dma.hbm_to_vmem [thread:$0]  %s17, 96, %s19, [#allocation3], 96, 96, 6
    $region5: #{tpu_custom_call.1} parent=1 // pred_fallthru
      _
    // Predicated region
    $region6: #{tpu_custom_call.1} parent=1 // pred_check
      _
    $region7: #{tpu_custom_call.1} parent=1 // pred_check_branch
      %26 = sbr.rel (0) target = $region9
    $region8: #{tpu_custom_call.1} parent=1 // pred_region
      %28 = vsyncadd [#allocation6], 288
      %s29 = sshll.u32 %s1, 4
      %s30 = int_to_ptr.hbm [resolvable:$true] %s29
      %s31 = sshll.u32 [#allocation5], 4
      %s32 = int_to_ptr.vmem [resolvable:$true] %s31
      %37 = dma.hbm_to_vmem [thread:$0]  %s30, 96, %s32, [#allocation6], 96, 96, 6
    $region9: #{tpu_custom_call.1} parent=1 // pred_fallthru
      _
    // Predicated region
    $region10: #{tpu_custom_call.1} parent=1 // pred_check
      _
    $region11: #{tpu_custom_call.1} parent=1 // pred_check_branch
      %39 = sbr.rel (0) target = $region13
    $region12: #{tpu_custom_call.1} parent=1 // pred_region
      %41 = vsyncadd [#allocation6], 0
      %s42 = sshll.u32 %s2, 4
      %s43 = int_to_ptr.hbm [resolvable:$true] %s42
      %s44 = sshll.u32 [#allocation7], 4
      %s45 = int_to_ptr.vmem [resolvable:$true] %s44
      %50 = dma.hbm_to_vmem [thread:$0]  %s43, 12288, %s45, [#allocation6], 128, 128, 8
    $region13: #{tpu_custom_call.1} parent=1 // pred_fallthru
      _
    // Predicated region
    $region14: #{tpu_custom_call.1} parent=1 // pred_check
      _
    $region15: #{tpu_custom_call.1} parent=1 // pred_check_branch
      %52 = sbr.rel (0) target = $region17
    $region16: #{tpu_custom_call.1} parent=1 // pred_region
      _
    $region17: #{tpu_custom_call.1} parent=1 // pred_fallthru
      _
    // Predicated region
    $region18: #{tpu_custom_call.1} parent=1 // pred_check
      _
    $region19: #{tpu_custom_call.1} parent=1 // pred_check_branch
      %54 = sbr.rel (0) target = $region21
    $region20: #{tpu_custom_call.1} parent=1 // pred_region
      %56 = dma.done [#allocation3], 384
    $region21: #{tpu_custom_call.1} parent=1 // pred_fallthru
      _
    // Predicated region
    $region22: #{tpu_custom_call.1} parent=1 // pred_check
      _
    $region23: #{tpu_custom_call.1} parent=1 // pred_check_branch
      %58 = sbr.rel (0) target = $region25
    $region24: #{tpu_custom_call.1} parent=1 // pred_region
      %60 = dma.done [#allocation6], 384
    $region25: #{tpu_custom_call.1} parent=1 // pred_fallthru
      _
    // Predicated region
    $region26: #{tpu_custom_call.1} parent=1 // pred_check
      _
    $region27: #{tpu_custom_call.1} parent=1 // pred_check_branch
      %62 = sbr.rel (0) target = $region29
    $region28: #{tpu_custom_call.1} parent=1 // pred_region
      %64 = dma.done [#allocation6], 12288
    $region29: #{tpu_custom_call.1} parent=1 // pred_fallthru
      _
    %v65 = vld [vmem:[#allocation2] sm:$0x3f]
    %v66 = vld [vmem:[#allocation2 + $0x6] sm:$0x3f]
    %v67 = vld [vmem:[#allocation2 + $0xc] sm:$0x3f]
    %v68 = vld [vmem:[#allocation2 + $0x12] sm:$0x3f]
    %v69 = vld [vmem:[#allocation7] sm:$0xff]
    %v70 = vld [vmem:[#allocation7 + $0x8] sm:$0xff]
    %v71 = vld [vmem:[#allocation7 + $0x10] sm:$0xff]
    %v72 = vld [vmem:[#allocation7 + $0x18] sm:$0xff]
    %v73 = vld [vmem:[#allocation7 + $0x20] sm:$0xff]
    %v74 = vld [vmem:[#allocation7 + $0x28] sm:$0xff]
    %v75 = vld [vmem:[#allocation7 + $0x30] sm:$0xff]
    %v76 = vld [vmem:[#allocation7 + $0x38] sm:$0xff]
    %v77 = vld [vmem:[#allocation7 + $0x40] sm:$0xff]
    %v78 = vld [vmem:[#allocation7 + $0x48] sm:$0xff]
    %v79 = vld [vmem:[#allocation7 + $0x50] sm:$0xff]
    %v80 = vld [vmem:[#allocation7 + $0x58] sm:$0xff]
    %v81 = vld [vmem:[#allocation7 + $0x60] sm:$0xff]
    %v82 = vld [vmem:[#allocation7 + $0x68] sm:$0xff]
    %v83 = vld [vmem:[#allocation7 + $0x70] sm:$0xff]
    %v84 = vld [vmem:[#allocation7 + $0x78] sm:$0xff]
    %v85 = vld [vmem:[#allocation7 + $0x80] sm:$0xff]
    %v86 = vld [vmem:[#allocation7 + $0x88] sm:$0xff]
    %v87 = vld [vmem:[#allocation7 + $0x90] sm:$0xff]
    %v88 = vld [vmem:[#allocation7 + $0x98] sm:$0xff]
    %v89 = vld [vmem:[#allocation7 + $0xa0] sm:$0xff]
    %v90 = vld [vmem:[#allocation7 + $0xa8] sm:$0xff]
    %v91 = vld [vmem:[#allocation7 + $0xb0] sm:$0xff]
    %v92 = vld [vmem:[#allocation7 + $0xb8] sm:$0xff]
    %v93 = vld [vmem:[#allocation7 + $0xc0] sm:$0xff]
    %v94 = vld [vmem:[#allocation7 + $0xc8] sm:$0xff]
    %v95 = vld [vmem:[#allocation7 + $0xd0] sm:$0xff]
    %v96 = vld [vmem:[#allocation7 + $0xd8] sm:$0xff]
    %v97 = vld [vmem:[#allocation7 + $0xe0] sm:$0xff]
    %v98 = vld [vmem:[#allocation7 + $0xe8] sm:$0xff]
    %v99 = vld [vmem:[#allocation7 + $0xf0] sm:$0xff]
    %v100 = vld [vmem:[#allocation7 + $0xf8] sm:$0xff]
    %v101 = vld [vmem:[#allocation7 + $0x100] sm:$0xff]
    %v102 = vld [vmem:[#allocation7 + $0x108] sm:$0xff]
    %v103 = vld [vmem:[#allocation7 + $0x110] sm:$0xff]
    %v104 = vld [vmem:[#allocation7 + $0x118] sm:$0xff]
    %v105 = vld [vmem:[#allocation7 + $0x120] sm:$0xff]
    %v106 = vld [vmem:[#allocation7 + $0x128] sm:$0xff]
    %v107 = vld [vmem:[#allocation7 + $0x130] sm:$0xff]
    %v108 = vld [vmem:[#allocation7 + $0x138] sm:$0xff]
    %v109 = vld [vmem:[#allocation7 + $0x140] sm:$0xff]
    %v110 = vld [vmem:[#allocation7 + $0x148] sm:$0xff]
    %v111 = vld [vmem:[#allocation7 + $0x150] sm:$0xff]
    %v112 = vld [vmem:[#allocation7 + $0x158] sm:$0xff]
    %v113 = vld [vmem:[#allocation7 + $0x160] sm:$0xff]
    %v114 = vld [vmem:[#allocation7 + $0x168] sm:$0xff]
    %v115 = vld [vmem:[#allocation7 + $0x170] sm:$0xff]
    %v116 = vld [vmem:[#allocation7 + $0x178] sm:$0xff]
    %v117 = vld [vmem:[#allocation5] sm:$0x3f]
    %v118 = vld [vmem:[#allocation5 + $0x6] sm:$0x3f]
    %v119 = vld [vmem:[#allocation5 + $0xc] sm:$0x3f]
    %v120 = vld [vmem:[#allocation5 + $0x12] sm:$0x3f]
    %v121 = vld [vmem:[#allocation7 + $0x180] sm:$0xff]
    %v122 = vld [vmem:[#allocation7 + $0x188] sm:$0xff]
    %v123 = vld [vmem:[#allocation7 + $0x190] sm:$0xff]
    %v124 = vld [vmem:[#allocation7 + $0x198] sm:$0xff]
    %v125 = vld [vmem:[#allocation7 + $0x1a0] sm:$0xff]
    %v126 = vld [vmem:[#allocation7 + $0x1a8] sm:$0xff]
    %v127 = vld [vmem:[#allocation7 + $0x1b0] sm:$0xff]
    %v128 = vld [vmem:[#allocation7 + $0x1b8] sm:$0xff]
    %v129 = vld [vmem:[#allocation7 + $0x1c0] sm:$0xff]
    %v130 = vld [vmem:[#allocation7 + $0x1c8] sm:$0xff]
    %v131 = vld [vmem:[#allocation7 + $0x1d0] sm:$0xff]
    %v132 = vld [vmem:[#allocation7 + $0x1d8] sm:$0xff]
    %v133 = vld [vmem:[#allocation7 + $0x1e0] sm:$0xff]
    %v134 = vld [vmem:[#allocation7 + $0x1e8] sm:$0xff]
    %v135 = vld [vmem:[#allocation7 + $0x1f0] sm:$0xff]
    %v136 = vld [vmem:[#allocation7 + $0x1f8] sm:$0xff]
    %v137 = vld [vmem:[#allocation7 + $0x200] sm:$0xff]
    %v138 = vld [vmem:[#allocation7 + $0x208] sm:$0xff]
    %v139 = vld [vmem:[#allocation7 + $0x210] sm:$0xff]
    %v140 = vld [vmem:[#allocation7 + $0x218] sm:$0xff]
    %v141 = vld [vmem:[#allocation7 + $0x220] sm:$0xff]
    %v142 = vld [vmem:[#allocation7 + $0x228] sm:$0xff]
    %v143 = vld [vmem:[#allocation7 + $0x230] sm:$0xff]
    %v144 = vld [vmem:[#allocation7 + $0x238] sm:$0xff]
    %v145 = vld [vmem:[#allocation7 + $0x240] sm:$0xff]
    %v146 = vld [vmem:[#allocation7 + $0x248] sm:$0xff]
    %v147 = vld [vmem:[#allocation7 + $0x250] sm:$0xff]
    %v148 = vld [vmem:[#allocation7 + $0x258] sm:$0xff]
    %v149 = vld [vmem:[#allocation7 + $0x260] sm:$0xff]
    %v150 = vld [vmem:[#allocation7 + $0x268] sm:$0xff]
    %v151 = vld [vmem:[#allocation7 + $0x270] sm:$0xff]
    %v152 = vld [vmem:[#allocation7 + $0x278] sm:$0xff]
    %v153 = vld [vmem:[#allocation7 + $0x280] sm:$0xff]
    %v154 = vld [vmem:[#allocation7 + $0x288] sm:$0xff]
    %v155 = vld [vmem:[#allocation7 + $0x290] sm:$0xff]
    %v156 = vld [vmem:[#allocation7 + $0x298] sm:$0xff]
    %v157 = vld [vmem:[#allocation7 + $0x2a0] sm:$0xff]
    %v158 = vld [vmem:[#allocation7 + $0x2a8] sm:$0xff]
    %v159 = vld [vmem:[#allocation7 + $0x2b0] sm:$0xff]
    %v160 = vld [vmem:[#allocation7 + $0x2b8] sm:$0xff]
    %v161 = vld [vmem:[#allocation7 + $0x2c0] sm:$0xff]
    %v162 = vld [vmem:[#allocation7 + $0x2c8] sm:$0xff]
    %v163 = vld [vmem:[#allocation7 + $0x2d0] sm:$0xff]
    %v164 = vld [vmem:[#allocation7 + $0x2d8] sm:$0xff]
    %v165 = vld [vmem:[#allocation7 + $0x2e0] sm:$0xff]
    %v166 = vld [vmem:[#allocation7 + $0x2e8] sm:$0xff]
    %v167 = vld [vmem:[#allocation7 + $0x2f0] sm:$0xff]
    %v168 = vld [vmem:[#allocation7 + $0x2f8] sm:$0xff]
    %173 = vst [vmem:[#allocation1] ss:$4 sm:$0xff] %v117
    %s174 = scalar_lea.vmem [#allocation1], 1
    %175 = vst [vmem:[%s174] ss:$4 sm:$0xff] %v118
    %s176 = scalar_lea.vmem [#allocation1], 2
    %177 = vst [vmem:[%s176] ss:$4 sm:$0xff] %v119
    %s178 = scalar_lea.vmem [#allocation1], 3
    %179 = vst [vmem:[%s178] ss:$4 sm:$0xff] %v120
    %v180 = vld.sshfl [vmem:[#allocation1] sm:$0xff pattern:$0x73625140]
    %v181 = vld.sshfl [vmem:[#allocation1 + $0x8] sm:$0xff pattern:$0x73625140]
    %v182 = vld.sshfl [vmem:[#allocation1 + $0x10] sm:$0xff pattern:$0x73625140]
    %186 = vmatpush.msra.mxu0 %v136
    %187 = vmatpush.msra.mxu0 %v135
    %188 = vmatpush.msra.mxu0 %v134
    %189 = vmatpush.msra.mxu0 %v133
    %190 = vmatpush.msra.mxu0 %v132
    %191 = vmatpush.msra.mxu0 %v131
    %192 = vmatpush.msra.mxu0 %v130
    %193 = vmatpush.msra.mxu0 %v129
    %194 = vmatpush.msra.mxu0 %v128
    %195 = vmatpush.msra.mxu0 %v127
    %196 = vmatpush.msra.mxu0 %v126
    %197 = vmatpush.msra.mxu0 %v125
    %198 = vmatpush.msra.mxu0 %v124
    %199 = vmatpush.msra.mxu0 %v123
    %200 = vmatpush.msra.mxu0 %v122
    %201 = vmatpush.msra.mxu0 %v121
    %202 = vmatmul.f32.gmra.mxu0 %v180
    %v203 = vpop.f32.mrf.mxu0
    %v204 = vadd.f32 0.0, %v203
    %205 = vdwg.mxu0
    %206 = vmatpush.msra.mxu0 %v152
    %207 = vmatpush.msra.mxu0 %v151
    %208 = vmatpush.msra.mxu0 %v150
    %209 = vmatpush.msra.mxu0 %v149
    %210 = vmatpush.msra.mxu0 %v148
    %211 = vmatpush.msra.mxu0 %v147
    %212 = vmatpush.msra.mxu0 %v146
    %213 = vmatpush.msra.mxu0 %v145
    %214 = vmatpush.msra.mxu0 %v144
    %215 = vmatpush.msra.mxu0 %v143
    %216 = vmatpush.msra.mxu0 %v142
    %217 = vmatpush.msra.mxu0 %v141
    %218 = vmatpush.msra.mxu0 %v140
    %219 = vmatpush.msra.mxu0 %v139
    %220 = vmatpush.msra.mxu0 %v138
    %221 = vmatpush.msra.mxu0 %v137
    %222 = vmatmul.f32.gmra.mxu0 %v181
    %v223 = vpop.f32.mrf.mxu0
    %v224 = vadd.f32 %v204, %v223
    %225 = vdwg.mxu0
    %226 = vmatpush.msra.mxu0 %v168
    %227 = vmatpush.msra.mxu0 %v167
    %228 = vmatpush.msra.mxu0 %v166
    %229 = vmatpush.msra.mxu0 %v165
    %230 = vmatpush.msra.mxu0 %v164
    %231 = vmatpush.msra.mxu0 %v163
    %232 = vmatpush.msra.mxu0 %v162
    %233 = vmatpush.msra.mxu0 %v161
    %234 = vmatpush.msra.mxu0 %v160
    %235 = vmatpush.msra.mxu0 %v159
    %236 = vmatpush.msra.mxu0 %v158
    %237 = vmatpush.msra.mxu0 %v157
    %238 = vmatpush.msra.mxu0 %v156
    %239 = vmatpush.msra.mxu0 %v155
    %240 = vmatpush.msra.mxu0 %v154
    %241 = vmatpush.msra.mxu0 %v153
    %242 = vmatmul.f32.gmra.mxu0 %v182
    %v243 = vpop.f32.mrf.mxu0
    %v244 = vadd.f32 %v224, %v243
    %245 = vdwg.mxu0
    %250 = vst [vmem:[#allocation1] ss:$4 sm:$0xff] %v65
    %s251 = scalar_lea.vmem [#allocation1], 1
    %252 = vst [vmem:[%s251] ss:$4 sm:$0xff] %v66
    %s253 = scalar_lea.vmem [#allocation1], 2
    %254 = vst [vmem:[%s253] ss:$4 sm:$0xff] %v67
    %s255 = scalar_lea.vmem [#allocation1], 3
    %256 = vst [vmem:[%s255] ss:$4 sm:$0xff] %v68
    %v257 = vld.sshfl [vmem:[#allocation1] sm:$0xff pattern:$0x73625140]
    %v258 = vld.sshfl [vmem:[#allocation1 + $0x8] sm:$0xff pattern:$0x73625140]
    %v259 = vld.sshfl [vmem:[#allocation1 + $0x10] sm:$0xff pattern:$0x73625140]
    %263 = vmatpush.msra.mxu0 %v84
    %264 = vmatpush.msra.mxu0 %v83
    %265 = vmatpush.msra.mxu0 %v82
    %266 = vmatpush.msra.mxu0 %v81
    %267 = vmatpush.msra.mxu0 %v80
    %268 = vmatpush.msra.mxu0 %v79
    %269 = vmatpush.msra.mxu0 %v78
    %270 = vmatpush.msra.mxu0 %v77
    %271 = vmatpush.msra.mxu0 %v76
    %272 = vmatpush.msra.mxu0 %v75
    %273 = vmatpush.msra.mxu0 %v74
    %274 = vmatpush.msra.mxu0 %v73
    %275 = vmatpush.msra.mxu0 %v72
    %276 = vmatpush.msra.mxu0 %v71
    %277 = vmatpush.msra.mxu0 %v70
    %278 = vmatpush.msra.mxu0 %v69
    %279 = vmatmul.f32.gmra.mxu0 %v257
    %v280 = vpop.f32.mrf.mxu0
    %v281 = vadd.f32 %v244, %v280
    %282 = vdwg.mxu0
    %283 = vmatpush.msra.mxu0 %v100
    %284 = vmatpush.msra.mxu0 %v99
    %285 = vmatpush.msra.mxu0 %v98
    %286 = vmatpush.msra.mxu0 %v97
    %287 = vmatpush.msra.mxu0 %v96
    %288 = vmatpush.msra.mxu0 %v95
    %289 = vmatpush.msra.mxu0 %v94
    %290 = vmatpush.msra.mxu0 %v93
    %291 = vmatpush.msra.mxu0 %v92
    %292 = vmatpush.msra.mxu0 %v91
    %293 = vmatpush.msra.mxu0 %v90
    %294 = vmatpush.msra.mxu0 %v89
    %295 = vmatpush.msra.mxu0 %v88
    %296 = vmatpush.msra.mxu0 %v87
    %297 = vmatpush.msra.mxu0 %v86
    %298 = vmatpush.msra.mxu0 %v85
    %299 = vmatmul.f32.gmra.mxu0 %v258
    %v300 = vpop.f32.mrf.mxu0
    %v301 = vadd.f32 %v281, %v300
    %302 = vdwg.mxu0
    %303 = vmatpush.msra.mxu0 %v116
    %304 = vmatpush.msra.mxu0 %v115
    %305 = vmatpush.msra.mxu0 %v114
    %306 = vmatpush.msra.mxu0 %v113
    %307 = vmatpush.msra.mxu0 %v112
    %308 = vmatpush.msra.mxu0 %v111
    %309 = vmatpush.msra.mxu0 %v110
    %310 = vmatpush.msra.mxu0 %v109
    %311 = vmatpush.msra.mxu0 %v108
    %312 = vmatpush.msra.mxu0 %v107
    %313 = vmatpush.msra.mxu0 %v106
    %314 = vmatpush.msra.mxu0 %v105
    %315 = vmatpush.msra.mxu0 %v104
    %316 = vmatpush.msra.mxu0 %v103
    %317 = vmatpush.msra.mxu0 %v102
    %318 = vmatpush.msra.mxu0 %v101
    %319 = vmatmul.f32.gmra.mxu0 %v259
    %v320 = vpop.f32.mrf.mxu0
    %v321 = vadd.f32 %v301, %v320
    %322 = vdwg.mxu0
    %v323 = vld [vmem:[%s3] sm:$0x1]
    %v325 = vperm.slane %v323, 0
    %v327 = vadd.f32 %v321, %v325
    %328 = vst [vmem:[#allocation8] sm:$0xff] %v327
    // Predicated region
    $region30: #{tpu_custom_call.1} parent=1 // pred_check
      _
    $region31: #{tpu_custom_call.1} parent=1 // pred_check_branch
      %330 = sbr.rel (0) target = $region33
    $region32: #{tpu_custom_call.1} parent=1 // pred_region
      %332 = vsyncadd [#allocation4], 96
      %s333 = sshll.u32 [#allocation8], 4
      %s334 = int_to_ptr.vmem [resolvable:$true] %s333
      %s335 = sshll.u32 %s4, 4
      %s336 = int_to_ptr.hbm [resolvable:$true] %s335
      %341 = dma.vmem_to_hbm [thread:$0]  %s334, 32, %s336, [#allocation4], 32, 32, 2
    $region33: #{tpu_custom_call.1} parent=1 // pred_fallthru
      _
    // Predicated region
    $region34: #{tpu_custom_call.1} parent=1 // pred_check
      _
    $region35: #{tpu_custom_call.1} parent=1 // pred_check_branch
      %343 = sbr.rel (0) target = $region37
    $region36: #{tpu_custom_call.1} parent=1 // pred_region
      %345 = dma.done [#allocation4], 128
    $region37: #{tpu_custom_call.1} parent=1 // pred_fallthru
      _
    %346 = vsyncpa [#allocation3], 1
    %347 = vsyncpa [#allocation6], 1
    %348 = vsyncpa [#allocation4], 1

</llo_original>
